<compile_context>
chip_gen: v7x
topology: tpu7x:2x2x1
jax: 0.10.0
libtpu: 0.0.40
codegen_flags: <defaults>
</compile_context>

<pallas_src>
import functools

import jax
import jax.numpy as jnp
from jax.experimental import pallas as pl
from jax.experimental.pallas import tpu as pltpu


VMEM_LIMIT = 32 * 1024 * 1024  # scoped VMEM limit hint (safe on v5e/v6e/v7x)


# ----------------------------- tiling helper -----------------------------

def _tile(dim, cap):
    """Largest tile <= cap that divides dim (full dim if dim <= cap)."""
    if dim <= cap:
        return dim
    t = cap
    while dim % t != 0:
        t //= 2
    return t


def _full_spec(shape):
    return pl.BlockSpec(shape, lambda: tuple(0 for _ in shape))


# ----------------------------- Pallas kernels -----------------------------

def _dense_kernel(x_ref, w_ref, b_ref, o_ref, acc_ref, *, act):
    """Tiled out = act(x @ w + b). bf16 operands, f32 accumulation."""
    @pl.when(pl.program_id(2) == 0)
    def _():
        acc_ref[...] = jnp.zeros(acc_ref.shape, jnp.float32)

    acc_ref[...] += jnp.dot(x_ref[...], w_ref[...],
                            preferred_element_type=jnp.float32)

    @pl.when(pl.program_id(2) == pl.num_programs(2) - 1)
    def _():
        y = acc_ref[...] + b_ref[...]          # bias epilogue, f32
        if act == "gelu":
            # TODO(synk): HF RoBERTa uses exact (erf) GELU; tanh approximation
            # kept here for robust Mosaic lowering.
            c = 0.7978845608028654             # sqrt(2/pi)
            y = 0.5 * y * (1.0 + jnp.tanh(c * (y + 0.044715 * y * y * y)))
        elif act == "tanh":
            y = jnp.tanh(y)
        o_ref[...] = y.astype(o_ref.dtype)


def _layernorm_kernel(x_ref, g_ref, b_ref, o_ref, *, eps):
    """Row-wise layernorm over the last axis (f32 math, bf16 out)."""
    x = x_ref[...].astype(jnp.float32)
    mu = jnp.mean(x, axis=-1, keepdims=True)
    var = jnp.mean((x - mu) * (x - mu), axis=-1, keepdims=True)
    y = (x - mu) * jax.lax.rsqrt(var + eps)
    o_ref[...] = (y * g_ref[...] + b_ref[...]).astype(o_ref.dtype)


def _add_layernorm_kernel(x_ref, r_ref, g_ref, b_ref, o_ref, *, eps):
    """Fused residual add + layernorm (f32 math, bf16 out)."""
    x = x_ref[...].astype(jnp.float32) + r_ref[...].astype(jnp.float32)
    mu = jnp.mean(x, axis=-1, keepdims=True)
    var = jnp.mean((x - mu) * (x - mu), axis=-1, keepdims=True)
    y = (x - mu) * jax.lax.rsqrt(var + eps)
    o_ref[...] = (y * g_ref[...] + b_ref[...]).astype(o_ref.dtype)


def _flash_attn_kernel(q_ref, k_ref, v_ref, bias_ref, o_ref,
                       m_sc, l_sc, acc_sc, *, scale):
    """Flash-attention style online softmax over kv tiles."""
    kv = pl.program_id(2)

    @pl.when(kv == 0)
    def _():
        m_sc[...] = jnp.full(m_sc.shape, -1e30, jnp.float32)
        l_sc[...] = jnp.zeros(l_sc.shape, jnp.float32)
        acc_sc[...] = jnp.zeros(acc_sc.shape, jnp.float32)

    q = q_ref[...].astype(jnp.float32)          # (1, tq, dh)
    k = k_ref[...].astype(jnp.float32)          # (1, tkv, dh)
    v = v_ref[...].astype(jnp.float32)          # (1, tkv, dh)

    s = jnp.einsum("bqd,bkd->bqk", q, k,
                   preferred_element_type=jnp.float32) * scale
    s = s + bias_ref[...]                       # precomputed additive mask

    m_new = jnp.maximum(m_sc[...], jnp.max(s, axis=-1, keepdims=True))
    alpha = jnp.exp(m_sc[...] - m_new)
    p = jnp.exp(s - m_new)
    l_sc[...] = alpha * l_sc[...] + jnp.sum(p, axis=-1, keepdims=True)
    acc_sc[...] = alpha * acc_sc[...] + jnp.einsum(
        "bqk,bkd->bqd", p, v, preferred_element_type=jnp.float32)
    m_sc[...] = m_new

    @pl.when(kv == pl.num_programs(2) - 1)
    def _():
        o_ref[...] = (acc_sc[...] *
                      pl.reciprocal(l_sc[...], approx=True)).astype(o_ref.dtype)


def _pooler_classifier_kernel(x_ref, pw_ref, pb_ref, cw_ref, cb_ref, o_ref):
    """Fused pooler (dense+tanh on CLS rows) + classifier, lane-dense output."""
    h = jnp.dot(x_ref[...], pw_ref[...],
                preferred_element_type=jnp.float32) + pb_ref[...]
    h = jnp.tanh(h)
    # dropout is identity at inference (eval mode)
    logits = jnp.dot(h.astype(cw_ref.dtype), cw_ref[...],
                     preferred_element_type=jnp.float32) + cb_ref[...]
    o_ref[...] = logits.astype(o_ref.dtype)


# ----------------------------- Pallas wrappers -----------------------------

def pallas_dense(x, w, b, act="none", out_dtype=jnp.bfloat16,
                 tm_cap=256, tn_cap=512, tk_cap=512):
    M, K = x.shape
    Kw, N = w.shape
    assert K == Kw
    tm, tn, tk = _tile(M, tm_cap), _tile(N, tn_cap), _tile(K, tk_cap)
    grid = (M // tm, N // tn, K // tk)
    b2 = b.reshape(1, N).astype(jnp.float32)
    return pl.pallas_call(
        functools.partial(_dense_kernel, act=act),
        out_shape=jax.ShapeDtypeStruct((M, N), out_dtype),
        grid_spec=pltpu.PrefetchScalarGridSpec(
            num_scalar_prefetch=0, grid=grid,
            in_specs=[pl.BlockSpec((tm, tk), lambda i, j, k: (i, k)),
                      pl.BlockSpec((tk, tn), lambda i, j, k: (k, j)),
                      pl.BlockSpec((1, tn), lambda i, j, k: (0, j))],
            out_specs=pl.BlockSpec((tm, tn), lambda i, j, k: (i, j)),
            scratch_shapes=[pltpu.VMEM((tm, tn), jnp.float32)]),
        compiler_params=pltpu.CompilerParams(
            dimension_semantics=("parallel", "parallel", "arbitrary"),
            vmem_limit_bytes=VMEM_LIMIT),
    )(x.astype(jnp.bfloat16), w.astype(jnp.bfloat16), b2)


def pallas_layernorm(x, gamma, beta, eps=1e-5):
    M, H = x.shape
    tm = _tile(M, 512)
    return pl.pallas_call(
        functools.partial(_layernorm_kernel, eps=eps),
        out_shape=jax.ShapeDtypeStruct((M, H), jnp.bfloat16),
        grid_spec=pltpu.PrefetchScalarGridSpec(
            num_scalar_prefetch=0, grid=(M // tm,),
            in_specs=[pl.BlockSpec((tm, H), lambda i: (i, 0)),
                      pl.BlockSpec((1, H), lambda i: (0, 0)),
                      pl.BlockSpec((1, H), lambda i: (0, 0))],
            out_specs=pl.BlockSpec((tm, H), lambda i: (i, 0))),
        compiler_params=pltpu.CompilerParams(
            dimension_semantics=("parallel",),
            vmem_limit_bytes=VMEM_LIMIT),
    )(x, gamma.reshape(1, H).astype(jnp.float32),
      beta.reshape(1, H).astype(jnp.float32))


def pallas_add_layernorm(x, residual, gamma, beta, eps=1e-5):
    M, H = x.shape
    tm = _tile(M, 512)
    return pl.pallas_call(
        functools.partial(_add_layernorm_kernel, eps=eps),
        out_shape=jax.ShapeDtypeStruct((M, H), jnp.bfloat16),
        grid_spec=pltpu.PrefetchScalarGridSpec(
            num_scalar_prefetch=0, grid=(M // tm,),
            in_specs=[pl.BlockSpec((tm, H), lambda i: (i, 0)),
                      pl.BlockSpec((tm, H), lambda i: (i, 0)),
                      pl.BlockSpec((1, H), lambda i: (0, 0)),
                      pl.BlockSpec((1, H), lambda i: (0, 0))],
            out_specs=pl.BlockSpec((tm, H), lambda i: (i, 0))),
        compiler_params=pltpu.CompilerParams(
            dimension_semantics=("parallel",),
            vmem_limit_bytes=VMEM_LIMIT),
    )(x, residual, gamma.reshape(1, H).astype(jnp.float32),
      beta.reshape(1, H).astype(jnp.float32))


def pallas_flash_attention(q, k, v, mask_bias, scale, tq_cap=128, tkv_cap=128):
    """q,k,v: (B*heads, S, dh); mask_bias: (B*heads, 1, S) additive f32."""
    BH, S, D = q.shape
    tq, tkv = _tile(S, tq_cap), _tile(S, tkv_cap)
    grid = (BH, S // tq, S // tkv)
    return pl.pallas_call(
        functools.partial(_flash_attn_kernel, scale=scale),
        out_shape=jax.ShapeDtypeStruct((BH, S, D), jnp.bfloat16),
        grid_spec=pltpu.PrefetchScalarGridSpec(
            num_scalar_prefetch=0, grid=grid,
            in_specs=[pl.BlockSpec((1, tq, D), lambda b, qi, ki: (b, qi, 0)),
                      pl.BlockSpec((1, tkv, D), lambda b, qi, ki: (b, ki, 0)),
                      pl.BlockSpec((1, tkv, D), lambda b, qi, ki: (b, ki, 0)),
                      pl.BlockSpec((1, 1, tkv), lambda b, qi, ki: (b, 0, ki))],
            out_specs=pl.BlockSpec((1, tq, D), lambda b, qi, ki: (b, qi, 0)),
            scratch_shapes=[pltpu.VMEM((1, tq, 1), jnp.float32),
                            pltpu.VMEM((1, tq, 1), jnp.float32),
                            pltpu.VMEM((1, tq, D), jnp.float32)]),
        compiler_params=pltpu.CompilerParams(
            dimension_semantics=("parallel", "parallel", "arbitrary"),
            vmem_limit_bytes=VMEM_LIMIT),
    )(q.astype(jnp.bfloat16), k.astype(jnp.bfloat16),
      v.astype(jnp.bfloat16), mask_bias)


def pallas_pooler_classifier(first_tok, pooler_w, pooler_b, cls_w_pad, cls_b_pad):
    """first_tok: (B, H). Returns lane-dense padded logits (B_pad, 128)."""
    B, H = first_tok.shape
    B_pad = max(8, ((B + 7) // 8) * 8)
    x = jnp.pad(first_tok, ((0, B_pad - B), (0, 0))).astype(jnp.bfloat16)
    Npad = cls_w_pad.shape[1]
    return pl.pallas_call(
        _pooler_classifier_kernel,
        out_shape=jax.ShapeDtypeStruct((B_pad, Npad), jnp.float32),
        in_specs=[_full_spec((B_pad, H)), _full_spec((H, H)),
                  _full_spec((1, H)), _full_spec((H, Npad)),
                  _full_spec((1, Npad))],
        out_specs=_full_spec((B_pad, Npad)),
        compiler_params=pltpu.CompilerParams(vmem_limit_bytes=VMEM_LIMIT),
    )(x, pooler_w.astype(jnp.bfloat16),
      pooler_b.reshape(1, H).astype(jnp.float32),
      cls_w_pad.astype(jnp.bfloat16),
      cls_b_pad.reshape(1, Npad).astype(jnp.float32))


# ----------------------------- Model definition -----------------------------

CFG = dict(
    vocab_size=100,
    max_pos=16,
    hidden=32,
    num_heads=4,
    intermediate=64,
    num_layers=2,
    class_num=3,
    pad_token_id=1,       # RoBERTa padding_idx
)

LANE = 128                # lane-dense padding for classifier output


def init_params(key, cfg):
    H, I = cfg["hidden"], cfg["intermediate"]
    keys = jax.random.split(key, 64)
    ki = iter(range(64))

    def normal(shape, scale=0.02):
        return scale * jax.random.normal(keys[next(ki)], shape, dtype=jnp.float32)

    # classifier weight padded to a lane-dense (H, 128) slab; extra cols zero.
    cls_w = normal((H, cfg["class_num"]))
    cls_w_pad = jnp.zeros((H, LANE), jnp.float32).at[:, :cfg["class_num"]].set(cls_w)

    params = {
        "word_emb": normal((cfg["vocab_size"], H)),
        "pos_emb": normal((cfg["max_pos"], H)),
        "type_emb": normal((1, H)),
        "emb_ln_g": jnp.ones((H,), jnp.float32),
        "emb_ln_b": jnp.zeros((H,), jnp.float32),
        "layers": [],
        "pooler_w": normal((H, H)).astype(jnp.bfloat16),
        "pooler_b": jnp.zeros((H,), jnp.float32),
        "cls_w_pad": cls_w_pad.astype(jnp.bfloat16),
        "cls_b_pad": jnp.zeros((LANE,), jnp.float32),
    }
    for _ in range(cfg["num_layers"]):
        layer = {
            # fused QKV projection weight (H, 3H)
            "qkv_w": normal((H, 3 * H)).astype(jnp.bfloat16),
            "qkv_b": jnp.zeros((3 * H,), jnp.float32),
            "o_w": normal((H, H)).astype(jnp.bfloat16),
            "o_b": jnp.zeros((H,), jnp.float32),
            "attn_ln_g": jnp.ones((H,), jnp.float32),
            "attn_ln_b": jnp.zeros((H,), jnp.float32),
            "i_w": normal((H, I)).astype(jnp.bfloat16),
            "i_b": jnp.zeros((I,), jnp.float32),
            "f_w": normal((I, H)).astype(jnp.bfloat16),
            "f_b": jnp.zeros((H,), jnp.float32),
            "ffn_ln_g": jnp.ones((H,), jnp.float32),
            "ffn_ln_b": jnp.zeros((H,), jnp.float32),
        }
        params["layers"].append(layer)
    return params


def roberta_for_classification_forward(params, input_ids, attention_mask, cfg):
    B, S = input_ids.shape
    H = cfg["hidden"]
    nH = cfg["num_heads"]
    dh = H // nH
    pad_id = cfg["pad_token_id"]

    # ---- embeddings (gathers: plain JAX glue) ----
    # RoBERTa position ids: offset by padding_idx, pad tokens get padding_idx.
    not_pad = (input_ids != pad_id).astype(jnp.int32)
    position_ids = jnp.cumsum(not_pad, axis=1) * not_pad + pad_id     # (B, S)
    emb = (params["word_emb"][input_ids]
           + params["pos_emb"][position_ids]
           + params["type_emb"][0][None, None, :])                    # (B, S, H)
    x = pallas_layernorm(emb.reshape(B * S, H),
                         params["emb_ln_g"], params["emb_ln_b"])      # bf16

    # additive attention-mask bias, precomputed once: (B*nH, 1, S) f32
    mask_bias = ((attention_mask.astype(jnp.float32) - 1.0) * 1e9)
    mask_bias = jnp.repeat(mask_bias, nH, axis=0)[:, None, :]

    def split_heads(t):   # (B*S, H) -> (B*nH, S, dh)
        return (t.reshape(B, S, nH, dh)
                 .transpose(0, 2, 1, 3)
                 .reshape(B * nH, S, dh))

    def merge_heads(t):   # (B*nH, S, dh) -> (B*S, H)
        return (t.reshape(B, nH, S, dh)
                 .transpose(0, 2, 1, 3)
                 .reshape(B * S, H))

    scale = 1.0 / (dh ** 0.5)

    # ---- encoder layers ----
    for layer in params["layers"]:
        qkv = pallas_dense(x, layer["qkv_w"], layer["qkv_b"])         # (M, 3H)
        q, k, v = jnp.split(qkv, 3, axis=-1)
        ctx = pallas_flash_attention(split_heads(q), split_heads(k),
                                     split_heads(v), mask_bias, scale)
        attn_out = pallas_dense(merge_heads(ctx), layer["o_w"], layer["o_b"])
        x = pallas_add_layernorm(x, attn_out,
                                 layer["attn_ln_g"], layer["attn_ln_b"])

        ffn = pallas_dense(x, layer["i_w"], layer["i_b"], act="gelu")
        ffn_out = pallas_dense(ffn, layer["f_w"], layer["f_b"])
        x = pallas_add_layernorm(x, ffn_out,
                                 layer["ffn_ln_g"], layer["ffn_ln_b"])

    # ---- fused pooler (dense+tanh on token 0) + dropout(identity) + classifier ----
    first_tok = x.reshape(B, S, H)[:, 0, :]                           # (B, H)
    logits_pad = pallas_pooler_classifier(first_tok,
                                          params["pooler_w"], params["pooler_b"],
                                          params["cls_w_pad"], params["cls_b_pad"])
    logits = logits_pad[:B, :cfg["class_num"]]
    return logits


# ----------------------------- main -----------------------------

if __name__ == "__main__":
    key = jax.random.PRNGKey(0)
    k_params, k_ids = jax.random.split(key)

    B, S = 2, 8
    params = init_params(k_params, CFG)

    input_ids = jax.random.randint(k_ids, (B, S), 0, CFG["vocab_size"],
                                   dtype=jnp.int32)
    attention_mask = jnp.array(
        [[1, 1, 1, 1, 1, 1, 1, 1],
         [1, 1, 1, 1, 1, 0, 0, 0]], dtype=jnp.int32)

    logits = roberta_for_classification_forward(params, input_ids,
                                                attention_mask, CFG)
    logits = jax.block_until_ready(logits)
    assert logits.shape == (B, CFG["class_num"])
    assert bool(jnp.all(jnp.isfinite(logits)))
    print("KERNEL_OK")
</pallas_src>

<mosaic_0001>
module attributes {stable_mosaic.version = 11 : i64} {
  func.func @_layernorm_kernel(%arg0: i32, %arg1: memref<16x32xf32, #tpu.memory_space<vmem>>, %arg2: memref<1x32xf32, #tpu.memory_space<vmem>>, %arg3: memref<1x32xf32, #tpu.memory_space<vmem>>, %arg4: memref<16x32xbf16, #tpu.memory_space<vmem>>) attributes {dimension_semantics = [#tpu.dimension_semantics<parallel>], iteration_bounds = array<i64: 1>, scalar_prefetch = 0 : i64, scratch_operands = 0 : i64, tpu.core_type = #tpu.core_type<tc>, window_params = [{transform_indices = @transform_0, window_bounds = array<i64: 16, 32>}, {pipeline_mode = #tpu.pipeline_mode<synchronous>, transform_indices = @transform_1, window_bounds = array<i64: 1, 32>}, {pipeline_mode = #tpu.pipeline_mode<synchronous>, transform_indices = @transform_2, window_bounds = array<i64: 1, 32>}, {transform_indices = @transform_3, window_bounds = array<i64: 16, 32>}]} {
    %c0 = arith.constant 0 : index
    %c0_0 = arith.constant 0 : index
    %0 = vector.load %arg1[%c0, %c0_0] : memref<16x32xf32, #tpu.memory_space<vmem>>, vector<16x32xf32>
    %cst = arith.constant dense<0.000000e+00> : vector<16xf32>
    %1 = vector.multi_reduction <add>, %0, %cst [1] : vector<16x32xf32> to vector<16xf32>
    %2 = vector.shape_cast %1 : vector<16xf32> to vector<16x1xf32>
    %cst_1 = arith.constant 3.200000e+01 : f32
    %3 = vector.broadcast %cst_1 : f32 to vector<16x1xf32>
    %4 = arith.divf %2, %3 : vector<16x1xf32>
    %5 = vector.broadcast %4 : vector<16x1xf32> to vector<16x32xf32>
    %6 = arith.subf %0, %5 : vector<16x32xf32>
    %7 = vector.broadcast %4 : vector<16x1xf32> to vector<16x32xf32>
    %8 = arith.subf %0, %7 : vector<16x32xf32>
    %9 = arith.mulf %6, %8 : vector<16x32xf32>
    %cst_2 = arith.constant dense<0.000000e+00> : vector<16xf32>
    %10 = vector.multi_reduction <add>, %9, %cst_2 [1] : vector<16x32xf32> to vector<16xf32>
    %11 = vector.shape_cast %10 : vector<16xf32> to vector<16x1xf32>
    %cst_3 = arith.constant 3.200000e+01 : f32
    %12 = vector.broadcast %cst_3 : f32 to vector<16x1xf32>
    %13 = arith.divf %11, %12 : vector<16x1xf32>
    %14 = vector.broadcast %4 : vector<16x1xf32> to vector<16x32xf32>
    %15 = arith.subf %0, %14 : vector<16x32xf32>
    %cst_4 = arith.constant 9.99999974E-6 : f32
    %16 = vector.broadcast %cst_4 : f32 to vector<16x1xf32>
    %17 = arith.addf %13, %16 : vector<16x1xf32>
    %18 = math.rsqrt %17 : vector<16x1xf32>
    %19 = vector.broadcast %18 : vector<16x1xf32> to vector<16x32xf32>
    %20 = arith.mulf %15, %19 : vector<16x32xf32>
    %c0_5 = arith.constant 0 : index
    %c0_6 = arith.constant 0 : index
    %21 = vector.load %arg2[%c0_5, %c0_6] : memref<1x32xf32, #tpu.memory_space<vmem>>, vector<1x32xf32>
    %22 = vector.broadcast %21 : vector<1x32xf32> to vector<16x32xf32>
    %23 = arith.mulf %20, %22 : vector<16x32xf32>
    %c0_7 = arith.constant 0 : index
    %c0_8 = arith.constant 0 : index
    %24 = vector.load %arg3[%c0_7, %c0_8] : memref<1x32xf32, #tpu.memory_space<vmem>>, vector<1x32xf32>
    %25 = vector.broadcast %24 : vector<1x32xf32> to vector<16x32xf32>
    %26 = arith.addf %23, %25 : vector<16x32xf32>
    %27 = arith.truncf %26 : vector<16x32xf32> to vector<16x32xbf16>
    %c0_9 = arith.constant 0 : index
    %c0_10 = arith.constant 0 : index
    %28 = vector.load %arg4[%c0_9, %c0_10] : memref<16x32xbf16, #tpu.memory_space<vmem>>, vector<16x32xbf16>
    tpu.vector_store %arg4[%c0_9, %c0_10], %27 {strides = array<i32>} : memref<16x32xbf16, #tpu.memory_space<vmem>>, vector<16x32xbf16>,
    return
  }
  func.func @transform_0(%arg0: i32) -> (i32, i32) {
    %c0_i32 = arith.constant 0 : i32
    %c0_i32_0 = arith.constant 0 : i32
    return %arg0, %c0_i32 : i32, i32
  }
  func.func @transform_1(%arg0: i32) -> (i32, i32) {
    %c0_i32 = arith.constant 0 : i32
    %c0_i32_0 = arith.constant 0 : i32
    %c0_i32_1 = arith.constant 0 : i32
    return %c0_i32, %c0_i32_0 : i32, i32
  }
  func.func @transform_2(%arg0: i32) -> (i32, i32) {
    %c0_i32 = arith.constant 0 : i32
    %c0_i32_0 = arith.constant 0 : i32
    %c0_i32_1 = arith.constant 0 : i32
    return %c0_i32, %c0_i32_0 : i32, i32
  }
  func.func @transform_3(%arg0: i32) -> (i32, i32) {
    %c0_i32 = arith.constant 0 : i32
    %c0_i32_0 = arith.constant 0 : i32
    return %arg0, %c0_i32 : i32, i32
  }
}

</mosaic_0001>

<llo_original>
// kernel: tpu_custom_call.1
$region0: #{tpu_custom_call.1}
  #allocation0 [shape = 'u32[]', space=smem, size = 0x4, offset = 0x4, fixed_abs, tag = 'smem constant byte address 0x4 - core index']
  #allocation1 [shape = 'u32[144,128]{1,0:T(1,128)}', space=vmem, size = 0x12000, scoped, tag = 'internal scratch']
  %s0 = inlined_call_operand.hbm [shape: f32[16,32], index: 0, kind: input, shape index: {}]
  %s1 = inlined_call_operand.vmem [shape: f32[1,32], index: 1, kind: input, shape index: {}]
  %s2 = inlined_call_operand.vmem [shape: f32[1,32], index: 2, kind: input, shape index: {}]
  %s3 = inlined_call_operand.hbm [shape: bf16[16,32], index: 3, kind: output, shape index: {}]
  %s4 = sld [smem:[#allocation0]]
  $region26: #{tpu_custom_call.1} parent=0
    _
  %s6 = ssub.s32 1, %s4
  %s7 = scalar_select 0, %s6, %s4
  $region1: #{tpu_custom_call.1} parent=0
    #allocation2 [shape = 'u8[8192]{0}', space=vmem, size = 0x2000, scoped, tag = 'input window, operand 0, single buffered']
    #allocation3 [shape = 's32[1]{0}', space=sflag, size = 0x4, scoped, tag = 'scoped memory for tpu_custom_call.1']
    #allocation4 [shape = 's32[1]{0}', space=sflag, size = 0x4, scoped, tag = 'scoped memory for tpu_custom_call.1']
    #allocation5 [shape = 'u8[4096]{0}', space=vmem, size = 0x1000, scoped, tag = 'output window, operand 0, single buffered']
    %8 = vsyncpa [#allocation3], 0
    %9 = vsyncpa [#allocation4], 0
    // Predicated region
    $region2: #{tpu_custom_call.1} parent=1 // pred_check
      _
    $region3: #{tpu_custom_call.1} parent=1 // pred_check_branch
      %11 = sbr.rel (0) target = $region5
    $region4: #{tpu_custom_call.1} parent=1 // pred_region
      %s13 = ssub.s32 256, 256
      %14 = vsyncadd [#allocation3], %s13
      %s15 = sshll.u32 [#allocation2], 4
      %s16 = int_to_ptr.vmem [resolvable:$true] %s15
      %21 = dma.hbm_to_vmem [thread:$0]  %s0, 256, %s16, [#allocation3], 128, 128, 8
    $region5: #{tpu_custom_call.1} parent=1 // pred_fallthru
      _
    // Predicated region
    $region6: #{tpu_custom_call.1} parent=1 // pred_check
      _
    $region7: #{tpu_custom_call.1} parent=1 // pred_check_branch
      %23 = sbr.rel (0) target = $region9
    $region8: #{tpu_custom_call.1} parent=1 // pred_region
      _
    $region9: #{tpu_custom_call.1} parent=1 // pred_fallthru
      _
    // Predicated region
    $region10: #{tpu_custom_call.1} parent=1 // pred_check
      _
    $region11: #{tpu_custom_call.1} parent=1 // pred_check_branch
      %25 = sbr.rel (0) target = $region13
    $region12: #{tpu_custom_call.1} parent=1 // pred_region
      _
    $region13: #{tpu_custom_call.1} parent=1 // pred_fallthru
      _
    // Predicated region
    $region14: #{tpu_custom_call.1} parent=1 // pred_check
      _
    $region15: #{tpu_custom_call.1} parent=1 // pred_check_branch
      %27 = sbr.rel (0) target = $region17
    $region16: #{tpu_custom_call.1} parent=1 // pred_region
      %28 = dma.done [#allocation3], 256
    $region17: #{tpu_custom_call.1} parent=1 // pred_fallthru
      _
    %v29 = vld [vmem:[#allocation2] sm:$0xff]
    %v30 = vld [vmem:[#allocation2 + $0x8] sm:$0xff]
    %vm31 = vcmask 261120
    %v32 = vsel %vm31, %v29, 0.0
    %33 = vadd.xlane.f32.xlu0 %v32
    %v34 = vpop.xlane.xlu0 %33
    %v35 = vsel %vm31, %v30, 0.0
    %36 = vadd.xlane.f32.xlu0 %v35
    %v37 = vpop.xlane.xlu0 %36
    %v38 = vrcp.pop 32.0
    %v39 = vmul.f32 %v34, %v38
    %v40 = vmul.f32 %v37, %v38
    %v41 = vsub.f32 %v29, %v39
    %v42 = vsub.f32 %v30, %v40
    %v43 = vmul.f32 %v41, %v41
    %v44 = vmul.f32 %v42, %v42
    %v45 = vsel %vm31, %v43, 0.0
    %46 = vadd.xlane.f32.xlu0 %v45
    %v47 = vpop.xlane.xlu0 %46
    %v48 = vsel %vm31, %v44, 0.0
    %49 = vadd.xlane.f32.xlu0 %v48
    %v50 = vpop.xlane.xlu0 %49
    %v51 = vmul.f32 %v47, %v38
    %v52 = vmul.f32 %v50, %v38
    %v53 = vadd.f32 %v51, 1e-05
    %v54 = vadd.f32 %v52, 1e-05
    %v55 = vrsqrt.pop %v53
    %v56 = vrsqrt.pop %v54
    %v57 = vmul.f32 %v41, %v55
    %v58 = vmul.f32 %v42, %v56
    %v59 = vld [vmem:[%s1] sm:$0x1]
    %v61 = vlaneseq
    %v62 = vshrl.u32 %v61, 7
    %v63 = vsub.s32 0, %v62
    %v64 = vrot.slane %v59, %v63
    %v66 = vmul.f32 %v57, %v64
    %v67 = vmul.f32 %v58, %v64
    %v68 = vld [vmem:[%s2] sm:$0x1]
    %v70 = vlaneseq
    %v71 = vshrl.u32 %v70, 7
    %v72 = vsub.s32 0, %v71
    %v73 = vrot.slane %v68, %v72
    %v75 = vadd.f32 %v66, %v73
    %v76 = vadd.f32 %v67, %v73
    %v77 = vpack.c.bf16 %v76, %v75
    %v79 = vunpack.c.l.b16 %v77
    %v80 = vunpack.c.h.b16 %v77
    %v81 = vpack.c.b16 %v79, %v79
    %v82 = vpack.c.b16 %v80, %v80
    %vm85 = vcmask 257024
    %86 = vst.msk [vmem:[#allocation5] sm:$0xf] %vm85, %v81
    %87 = vst.msk [vmem:[#allocation5 + $0x4] sm:$0xf] %vm85, %v82
    // Predicated region
    $region18: #{tpu_custom_call.1} parent=1 // pred_check
      _
    $region19: #{tpu_custom_call.1} parent=1 // pred_check_branch
      %89 = sbr.rel (0) target = $region21
    $region20: #{tpu_custom_call.1} parent=1 // pred_region
      %s91 = ssub.s32 128, 128
      %92 = vsyncadd [#allocation4], %s91
      %s93 = sshll.u32 [#allocation5], 4
      %s94 = int_to_ptr.vmem [resolvable:$true] %s93
      %99 = dma.vmem_to_hbm [thread:$0]  %s94, 128, %s3, [#allocation4], 64, 64, 4
    $region21: #{tpu_custom_call.1} parent=1 // pred_fallthru
      _
    // Predicated region
    $region22: #{tpu_custom_call.1} parent=1 // pred_check
      _
    $region23: #{tpu_custom_call.1} parent=1 // pred_check_branch
      %101 = sbr.rel (0) target = $region25
    $region24: #{tpu_custom_call.1} parent=1 // pred_region
      %102 = dma.done [#allocation4], 128
    $region25: #{tpu_custom_call.1} parent=1 // pred_fallthru
      _
    %103 = vsyncpa [#allocation3], 1
    %104 = vsyncpa [#allocation4], 1

</llo_original>
